<compile_context>
chip_gen: v7x
topology: tpu7x:2x2x1
jax: 0.10.0
libtpu: 0.0.40
codegen_flags: <defaults>
</compile_context>

<pallas_src>
import functools

import jax
import jax.numpy as jnp
from jax.experimental import pallas as pl
from jax.experimental.pallas import tpu as pltpu

_INT32_MIN = -(2 ** 31)


def _topk_kernel(x_ref, w_ref, inv_ref, o_ref, *, k: int):
    x = x_ref[...]                                   # (N, F), native dtype (MXU input)
    w_row = w_ref[...]                               # (1, F)
    inv_norm = inv_ref[0, 0]                         # scalar f32: 1 / ||scorer||
    n = x.shape[0]

    # Raw (unnormalized) scores, lane-dense (1, N): w_row @ x.T on the MXU.
    # Ordering of raw scores == ordering of normalized scores (||w|| > 0).
    scores = jax.lax.dot_general(
        w_row.astype(x.dtype), x,
        dimension_numbers=(((1,), (1,)), ((), ())),
        preferred_element_type=jnp.float32,
    )                                                # (1, N) f32

    # Monotone f32 -> int32 key (order-preserving total order; robust to -inf/-0.0).
    bits = pltpu.bitcast(scores, jnp.int32)
    key = jnp.where(bits < 0, bits ^ jnp.int32(0x7FFFFFFF), bits)

    # Pack (value key with low bits cleared, N-1-col) so one max per iteration yields
    # the i-th maximum AND its smallest attaining index. All packed keys are distinct
    # (index lives in the low bits), so `== max` is always a true one-hot.
    idx_mod = pl.next_power_of_2(n)                  # bits reserved for the index
    col_ids = jax.lax.broadcasted_iota(jnp.int32, (1, n), 1)
    rev_col = jnp.int32(n - 1) - col_ids
    packed0 = (key & jnp.int32(~(idx_mod - 1))) | rev_col        # (1, N) int32

    row_iota = jax.lax.broadcasted_iota(jnp.int32, (k, 1), 0)    # (k, 1)
    winners = jnp.full((k, 1), _INT32_MIN, dtype=jnp.int32)

    # Selection loop: the serial critical path is one cross-lane max + one select per
    # iteration. k is small & static -> unrolled. (For large N, pre-reduce to per-tile
    # candidates first so this chain stays short.)
    work = packed0
    for r in range(k):
        m = jnp.max(work)                                        # i-th largest packed key
        winners = jnp.where(row_iota == r, m, winners)           # off the critical path
        work = jnp.where(work == m, jnp.int32(_INT32_MIN), work)

    # One broadcast compare builds the whole (k, N) selection matrix (one-hot rows).
    sel = packed0 == winners                                     # (k, N) bool

    # Exact selected scores via masked row-sum; one vectorized tanh for all k.
    vals = jnp.sum(jnp.where(sel, scores, 0.0), axis=-1, keepdims=True)  # (k, 1) f32
    scale = jnp.tanh(vals * inv_norm)                                    # (k, 1) f32

    # Gather with an exact 0/1 one-hot in x's dtype: (k,N) @ (N,F) on the MXU,
    # then apply the tanh scale on the VPU.
    onehot = sel.astype(x.dtype)                                 # (k, N)
    gathered = jnp.dot(onehot, x, preferred_element_type=jnp.float32)    # (k, F) f32
    o_ref[...] = (gathered * scale).astype(o_ref.dtype)          # lane-dense along F


@functools.partial(jax.jit, static_argnames=("k",))
def topk_forward(node_embs: jax.Array, scorer: jax.Array, *, k: int) -> jax.Array:
    """node_embs: (N, F), scorer: (F, 1) -> (F, k) float32 (matches PyTorch out.t())."""
    n, f = node_embs.shape
    assert scorer.shape == (f, 1)
    assert 0 < k <= n

    # Layout / scalar plumbing outside the kernel.
    scorer_row = scorer.reshape(1, f)
    w32 = scorer_row.astype(jnp.float32)
    inv_norm = jax.lax.rsqrt(jnp.sum(w32 * w32)).reshape(1, 1)   # (1, 1) f32 -> SMEM

    kernel = functools.partial(_topk_kernel, k=k)
    out_kf = pl.pallas_call(
        kernel,
        out_shape=jax.ShapeDtypeStruct((k, f), jnp.float32),
        in_specs=[
            pl.BlockSpec(memory_space=pltpu.MemorySpace.VMEM),   # node_embs
            pl.BlockSpec(memory_space=pltpu.MemorySpace.VMEM),   # scorer row
            pl.BlockSpec(memory_space=pltpu.MemorySpace.SMEM),   # 1/||scorer||
        ],
        out_specs=pl.BlockSpec(memory_space=pltpu.MemorySpace.VMEM),
    )(node_embs, scorer_row, inv_norm)

    # Final transpose to (F, k) fuses into the jitted wrapper (single dispatch).
    return out_kf.T


def _reference(node_embs, scorer, k):
    scores = (node_embs @ scorer) / jnp.linalg.norm(scorer)      # (N, 1)
    _, idx = jax.lax.top_k(scores.reshape(-1), k)
    out = node_embs[idx] * jnp.tanh(scores[idx].reshape(-1, 1))
    return out.T


if __name__ == "__main__":
    feats, n_nodes, k = 32, 64, 8

    key = jax.random.PRNGKey(0)
    k_x, k_w = jax.random.split(key)

    # Node embeddings (synthetic).
    node_embs = jax.random.normal(k_x, (n_nodes, feats), dtype=jnp.float32)

    # Scorer parameter, xavier_uniform_ like PyTorch: bound = sqrt(6/(fan_in+fan_out))
    # with fan_in = 1, fan_out = feats for a (feats, 1) tensor.
    bound = (6.0 / (feats + 1)) ** 0.5
    scorer = jax.random.uniform(
        k_w, (feats, 1), dtype=jnp.float32, minval=-bound, maxval=bound
    )

    out = topk_forward(node_embs, scorer, k=k)
    out = jax.block_until_ready(out)

    ref = _reference(node_embs, scorer, k)
    assert out.shape == (feats, k)
    assert jnp.allclose(out, ref, atol=1e-5, rtol=1e-5)

    print("KERNEL_OK")
</pallas_src>

<mosaic_0001>
module attributes {stable_mosaic.version = 11 : i64} {
  func.func @_topk_kernel(%arg0: memref<64x32xf32, #tpu.memory_space<vmem>>, %arg1: memref<1x32xf32, #tpu.memory_space<vmem>>, %arg2: memref<1x1xf32, #tpu.memory_space<smem>>, %arg3: memref<8x32xf32, #tpu.memory_space<vmem>>) attributes {dimension_semantics = [], scalar_prefetch = 0 : i64, scratch_operands = 0 : i64, tpu.core_type = #tpu.core_type<tc>} {
    %c0 = arith.constant 0 : index
    %c0_0 = arith.constant 0 : index
    %0 = vector.load %arg0[%c0, %c0_0] : memref<64x32xf32, #tpu.memory_space<vmem>>, vector<64x32xf32>
    %c0_1 = arith.constant 0 : index
    %c0_2 = arith.constant 0 : index
    %1 = vector.load %arg1[%c0_1, %c0_2] : memref<1x32xf32, #tpu.memory_space<vmem>>, vector<1x32xf32>
    %c0_3 = arith.constant 0 : index
    %c0_4 = arith.constant 0 : index
    %2 = memref.load %arg2[%c0_3, %c0_4] : memref<1x1xf32, #tpu.memory_space<smem>>
    %cst = arith.constant dense<0.000000e+00> : vector<1x64xf32>
    %3 = tpu.matmul %1, %0, %cst {dimension_numbers = #tpu.dot_dimension_numbers<[1], [1], [0], [0], [0, 0, 1, 0], [], []>} : vector<1x32xf32>, vector<64x32xf32>, vector<1x64xf32> -> vector<1x64xf32>
    %4 = tpu.bitcast %3 : vector<1x64xf32> -> vector<1x64xi32>
    %c0_i32 = arith.constant 0 : i32
    %5 = vector.broadcast %c0_i32 : i32 to vector<1x64xi32>
    %6 = arith.cmpi slt, %4, %5 : vector<1x64xi32>
    %c2147483647_i32 = arith.constant 2147483647 : i32
    %7 = vector.broadcast %c2147483647_i32 : i32 to vector<1x64xi32>
    %8 = arith.xori %4, %7 : vector<1x64xi32>
    %9 = arith.select %6, %8, %4 : vector<1x64xi1>, vector<1x64xi32>
    %10 = tpu.iota {dimensions = array<i32: 1>} : vector<1x64xi32>
    %c63_i32 = arith.constant 63 : i32
    %11 = vector.broadcast %c63_i32 : i32 to vector<1x64xi32>
    %12 = arith.subi %11, %10 : vector<1x64xi32>
    %c-64_i32 = arith.constant -64 : i32
    %13 = vector.broadcast %c-64_i32 : i32 to vector<1x64xi32>
    %14 = arith.andi %9, %13 : vector<1x64xi32>
    %15 = arith.ori %14, %12 : vector<1x64xi32>
    %16 = tpu.iota {dimensions = array<i32: 0>} : vector<8x1xi32>
    %c-2147483648_i32 = arith.constant -2147483648 : i32
    %17 = vector.broadcast %c-2147483648_i32 : i32 to vector<8x1xi32>
    %18 = vector.shape_cast %15 : vector<1x64xi32> to vector<1x1x64xi32>
    %cst_5 = arith.constant dense<-2147483648> : vector<1xi32>
    %19 = vector.multi_reduction <maxsi>, %18, %cst_5 [1, 2] : vector<1x1x64xi32> to vector<1xi32>
    %20 = vector.shape_cast %19 : vector<1xi32> to vector<1x1x1xi32>
    %21 = vector.extract %20[0, 0, 0] : i32 from vector<1x1x1xi32>
    %c0_i32_6 = arith.constant 0 : i32
    %22 = vector.broadcast %c0_i32_6 : i32 to vector<8x1xi32>
    %23 = arith.cmpi eq, %16, %22 : vector<8x1xi32>
    %24 = vector.broadcast %21 : i32 to vector<8x1xi32>
    %25 = arith.select %23, %24, %17 : vector<8x1xi1>, vector<8x1xi32>
    %26 = vector.broadcast %21 : i32 to vector<1x64xi32>
    %27 = arith.cmpi eq, %15, %26 : vector<1x64xi32>
    %c-2147483648_i32_7 = arith.constant -2147483648 : i32
    %28 = vector.broadcast %c-2147483648_i32_7 : i32 to vector<1x64xi32>
    %29 = arith.select %27, %28, %15 : vector<1x64xi1>, vector<1x64xi32>
    %30 = vector.shape_cast %29 : vector<1x64xi32> to vector<1x1x64xi32>
    %cst_8 = arith.constant dense<-2147483648> : vector<1xi32>
    %31 = vector.multi_reduction <maxsi>, %30, %cst_8 [1, 2] : vector<1x1x64xi32> to vector<1xi32>
    %32 = vector.shape_cast %31 : vector<1xi32> to vector<1x1x1xi32>
    %33 = vector.extract %32[0, 0, 0] : i32 from vector<1x1x1xi32>
    %c1_i32 = arith.constant 1 : i32
    %34 = vector.broadcast %c1_i32 : i32 to vector<8x1xi32>
    %35 = arith.cmpi eq, %16, %34 : vector<8x1xi32>
    %36 = vector.broadcast %33 : i32 to vector<8x1xi32>
    %37 = arith.select %35, %36, %25 : vector<8x1xi1>, vector<8x1xi32>
    %38 = vector.broadcast %33 : i32 to vector<1x64xi32>
    %39 = arith.cmpi eq, %29, %38 : vector<1x64xi32>
    %c-2147483648_i32_9 = arith.constant -2147483648 : i32
    %40 = vector.broadcast %c-2147483648_i32_9 : i32 to vector<1x64xi32>
    %41 = arith.select %39, %40, %29 : vector<1x64xi1>, vector<1x64xi32>
    %42 = vector.shape_cast %41 : vector<1x64xi32> to vector<1x1x64xi32>
    %cst_10 = arith.constant dense<-2147483648> : vector<1xi32>
    %43 = vector.multi_reduction <maxsi>, %42, %cst_10 [1, 2] : vector<1x1x64xi32> to vector<1xi32>
    %44 = vector.shape_cast %43 : vector<1xi32> to vector<1x1x1xi32>
    %45 = vector.extract %44[0, 0, 0] : i32 from vector<1x1x1xi32>
    %c2_i32 = arith.constant 2 : i32
    %46 = vector.broadcast %c2_i32 : i32 to vector<8x1xi32>
    %47 = arith.cmpi eq, %16, %46 : vector<8x1xi32>
    %48 = vector.broadcast %45 : i32 to vector<8x1xi32>
    %49 = arith.select %47, %48, %37 : vector<8x1xi1>, vector<8x1xi32>
    %50 = vector.broadcast %45 : i32 to vector<1x64xi32>
    %51 = arith.cmpi eq, %41, %50 : vector<1x64xi32>
    %c-2147483648_i32_11 = arith.constant -2147483648 : i32
    %52 = vector.broadcast %c-2147483648_i32_11 : i32 to vector<1x64xi32>
    %53 = arith.select %51, %52, %41 : vector<1x64xi1>, vector<1x64xi32>
    %54 = vector.shape_cast %53 : vector<1x64xi32> to vector<1x1x64xi32>
    %cst_12 = arith.constant dense<-2147483648> : vector<1xi32>
    %55 = vector.multi_reduction <maxsi>, %54, %cst_12 [1, 2] : vector<1x1x64xi32> to vector<1xi32>
    %56 = vector.shape_cast %55 : vector<1xi32> to vector<1x1x1xi32>
    %57 = vector.extract %56[0, 0, 0] : i32 from vector<1x1x1xi32>
    %c3_i32 = arith.constant 3 : i32
    %58 = vector.broadcast %c3_i32 : i32 to vector<8x1xi32>
    %59 = arith.cmpi eq, %16, %58 : vector<8x1xi32>
    %60 = vector.broadcast %57 : i32 to vector<8x1xi32>
    %61 = arith.select %59, %60, %49 : vector<8x1xi1>, vector<8x1xi32>
    %62 = vector.broadcast %57 : i32 to vector<1x64xi32>
    %63 = arith.cmpi eq, %53, %62 : vector<1x64xi32>
    %c-2147483648_i32_13 = arith.constant -2147483648 : i32
    %64 = vector.broadcast %c-2147483648_i32_13 : i32 to vector<1x64xi32>
    %65 = arith.select %63, %64, %53 : vector<1x64xi1>, vector<1x64xi32>
    %66 = vector.shape_cast %65 : vector<1x64xi32> to vector<1x1x64xi32>
    %cst_14 = arith.constant dense<-2147483648> : vector<1xi32>
    %67 = vector.multi_reduction <maxsi>, %66, %cst_14 [1, 2] : vector<1x1x64xi32> to vector<1xi32>
    %68 = vector.shape_cast %67 : vector<1xi32> to vector<1x1x1xi32>
    %69 = vector.extract %68[0, 0, 0] : i32 from vector<1x1x1xi32>
    %c4_i32 = arith.constant 4 : i32
    %70 = vector.broadcast %c4_i32 : i32 to vector<8x1xi32>
    %71 = arith.cmpi eq, %16, %70 : vector<8x1xi32>
    %72 = vector.broadcast %69 : i32 to vector<8x1xi32>
    %73 = arith.select %71, %72, %61 : vector<8x1xi1>, vector<8x1xi32>
    %74 = vector.broadcast %69 : i32 to vector<1x64xi32>
    %75 = arith.cmpi eq, %65, %74 : vector<1x64xi32>
    %c-2147483648_i32_15 = arith.constant -2147483648 : i32
    %76 = vector.broadcast %c-2147483648_i32_15 : i32 to vector<1x64xi32>
    %77 = arith.select %75, %76, %65 : vector<1x64xi1>, vector<1x64xi32>
    %78 = vector.shape_cast %77 : vector<1x64xi32> to vector<1x1x64xi32>
    %cst_16 = arith.constant dense<-2147483648> : vector<1xi32>
    %79 = vector.multi_reduction <maxsi>, %78, %cst_16 [1, 2] : vector<1x1x64xi32> to vector<1xi32>
    %80 = vector.shape_cast %79 : vector<1xi32> to vector<1x1x1xi32>
    %81 = vector.extract %80[0, 0, 0] : i32 from vector<1x1x1xi32>
    %c5_i32 = arith.constant 5 : i32
    %82 = vector.broadcast %c5_i32 : i32 to vector<8x1xi32>
    %83 = arith.cmpi eq, %16, %82 : vector<8x1xi32>
    %84 = vector.broadcast %81 : i32 to vector<8x1xi32>
    %85 = arith.select %83, %84, %73 : vector<8x1xi1>, vector<8x1xi32>
    %86 = vector.broadcast %81 : i32 to vector<1x64xi32>
    %87 = arith.cmpi eq, %77, %86 : vector<1x64xi32>
    %c-2147483648_i32_17 = arith.constant -2147483648 : i32
    %88 = vector.broadcast %c-2147483648_i32_17 : i32 to vector<1x64xi32>
    %89 = arith.select %87, %88, %77 : vector<1x64xi1>, vector<1x64xi32>
    %90 = vector.shape_cast %89 : vector<1x64xi32> to vector<1x1x64xi32>
    %cst_18 = arith.constant dense<-2147483648> : vector<1xi32>
    %91 = vector.multi_reduction <maxsi>, %90, %cst_18 [1, 2] : vector<1x1x64xi32> to vector<1xi32>
    %92 = vector.shape_cast %91 : vector<1xi32> to vector<1x1x1xi32>
    %93 = vector.extract %92[0, 0, 0] : i32 from vector<1x1x1xi32>
    %c6_i32 = arith.constant 6 : i32
    %94 = vector.broadcast %c6_i32 : i32 to vector<8x1xi32>
    %95 = arith.cmpi eq, %16, %94 : vector<8x1xi32>
    %96 = vector.broadcast %93 : i32 to vector<8x1xi32>
    %97 = arith.select %95, %96, %85 : vector<8x1xi1>, vector<8x1xi32>
    %98 = vector.broadcast %93 : i32 to vector<1x64xi32>
    %99 = arith.cmpi eq, %89, %98 : vector<1x64xi32>
    %c-2147483648_i32_19 = arith.constant -2147483648 : i32
    %100 = vector.broadcast %c-2147483648_i32_19 : i32 to vector<1x64xi32>
    %101 = arith.select %99, %100, %89 : vector<1x64xi1>, vector<1x64xi32>
    %102 = vector.shape_cast %101 : vector<1x64xi32> to vector<1x1x64xi32>
    %cst_20 = arith.constant dense<-2147483648> : vector<1xi32>
    %103 = vector.multi_reduction <maxsi>, %102, %cst_20 [1, 2] : vector<1x1x64xi32> to vector<1xi32>
    %104 = vector.shape_cast %103 : vector<1xi32> to vector<1x1x1xi32>
    %105 = vector.extract %104[0, 0, 0] : i32 from vector<1x1x1xi32>
    %c7_i32 = arith.constant 7 : i32
    %106 = vector.broadcast %c7_i32 : i32 to vector<8x1xi32>
    %107 = arith.cmpi eq, %16, %106 : vector<8x1xi32>
    %108 = vector.broadcast %105 : i32 to vector<8x1xi32>
    %109 = arith.select %107, %108, %97 : vector<8x1xi1>, vector<8x1xi32>
    %110 = vector.broadcast %15 : vector<1x64xi32> to vector<8x64xi32>
    %111 = vector.broadcast %109 : vector<8x1xi32> to vector<8x64xi32>
    %112 = arith.cmpi eq, %110, %111 : vector<8x64xi32>
    %cst_21 = arith.constant 0.000000e+00 : f32
    %113 = vector.shape_cast %3 : vector<1x64xf32> to vector<1x64xf32>
    %114 = vector.broadcast %113 : vector<1x64xf32> to vector<8x64xf32>
    %115 = vector.broadcast %cst_21 : f32 to vector<8x64xf32>
    %116 = arith.select %112, %114, %115 : vector<8x64xi1>, vector<8x64xf32>
    %cst_22 = arith.constant dense<0.000000e+00> : vector<8xf32>
    %117 = vector.multi_reduction <add>, %116, %cst_22 [1] : vector<8x64xf32> to vector<8xf32>
    %118 = vector.shape_cast %117 : vector<8xf32> to vector<8x1xf32>
    %119 = vector.broadcast %2 : f32 to vector<8x1xf32>
    %120 = arith.mulf %118, %119 : vector<8x1xf32>
    %121 = math.tanh %120 : vector<8x1xf32>
    %122 = arith.extui %112 : vector<8x64xi1> to vector<8x64xi32>
    %123 = arith.sitofp %122 : vector<8x64xi32> to vector<8x64xf32>
    %cst_23 = arith.constant dense<0.000000e+00> : vector<8x32xf32>
    %124 = tpu.matmul %123, %0, %cst_23 {dimension_numbers = #tpu.dot_dimension_numbers<[1], [0], [0], [1], [0, 0, 1, 1], [], []>} : vector<8x64xf32>, vector<64x32xf32>, vector<8x32xf32> -> vector<8x32xf32>
    %125 = vector.broadcast %121 : vector<8x1xf32> to vector<8x32xf32>
    %126 = arith.mulf %124, %125 : vector<8x32xf32>
    %c0_24 = arith.constant 0 : index
    %c0_25 = arith.constant 0 : index
    %127 = vector.load %arg3[%c0_24, %c0_25] : memref<8x32xf32, #tpu.memory_space<vmem>>, vector<8x32xf32>
    tpu.vector_store %arg3[%c0_24, %c0_25], %126 {strides = array<i32>} : memref<8x32xf32, #tpu.memory_space<vmem>>, vector<8x32xf32>,
    return
  }
}

</mosaic_0001>

<llo_original>
// kernel: topk_forward.1
$region0: #{topk_forward.1}
  #allocation0 [shape = 'u32[]', space=smem, size = 0x4, offset = 0x4, fixed_abs, tag = 'smem constant byte address 0x4 - core index']
  #allocation1 [shape = 'u32[144,128]{1,0:T(1,128)}', space=vmem, size = 0x12000, scoped, tag = 'internal scratch']
  #allocation2 [shape = 'f32[1,1]{1,0:T(1,128)S(6)}', space=smem, size = 0x200, scoped, tag = 'scoped memory for topk_forward.1']
  %s0 = inlined_call_operand.vmem [shape: f32[64,32], index: 0, kind: input, shape index: {}]
  %s1 = inlined_call_operand.vmem [shape: f32[1,32], index: 1, kind: input, shape index: {}]
  %s2 = inlined_call_operand.<no memory space> [shape: f32[1,1], index: 2, kind: input, shape index: {}]
  %s3 = inlined_call_operand.hbm [shape: f32[8,32], index: 3, kind: output, shape index: {}]
  %s4 = sld [smem:[#allocation0]]
  $region22: #{topk_forward.1} parent=0
    _
  %s6 = ssub.s32 1, %s4
  %s7 = scalar_select 0, %s6, %s4
  %8 = sst [smem:[#allocation2]] %s2
  $region1: #{topk_forward.1} parent=0
    #allocation3 [shape = 'u8[4096]{0}', space=vmem, size = 0x1000, scoped, tag = 'output window, operand 0, single buffered']
    #allocation4 [shape = 's32[1]{0}', space=sflag, size = 0x4, scoped, tag = 'scoped memory for topk_forward.1']
    %9 = vsyncpa [#allocation4], 0
    // Predicated region
    $region2: #{topk_forward.1} parent=1 // pred_check
      _
    $region3: #{topk_forward.1} parent=1 // pred_check_branch
      %11 = sbr.rel (0) target = $region5
    $region4: #{topk_forward.1} parent=1 // pred_region
      _
    $region5: #{topk_forward.1} parent=1 // pred_fallthru
      _
    // Predicated region
    $region6: #{topk_forward.1} parent=1 // pred_check
      _
    $region7: #{topk_forward.1} parent=1 // pred_check_branch
      %13 = sbr.rel (0) target = $region9
    $region8: #{topk_forward.1} parent=1 // pred_region
      _
    $region9: #{topk_forward.1} parent=1 // pred_fallthru
      _
    // Predicated region
    $region10: #{topk_forward.1} parent=1 // pred_check
      _
    $region11: #{topk_forward.1} parent=1 // pred_check_branch
      %15 = sbr.rel (0) target = $region13
    $region12: #{topk_forward.1} parent=1 // pred_region
      _
    $region13: #{topk_forward.1} parent=1 // pred_fallthru
      _
    %v16 = vld [vmem:[%s0] sm:$0xff]
    %v17 = vld [vmem:[%s0 + $0x8] sm:$0xff]
    %v18 = vld [vmem:[%s0 + $0x10] sm:$0xff]
    %v19 = vld [vmem:[%s0 + $0x18] sm:$0xff]
    %v20 = vld [vmem:[%s0 + $0x20] sm:$0xff]
    %v21 = vld [vmem:[%s0 + $0x28] sm:$0xff]
    %v22 = vld [vmem:[%s0 + $0x30] sm:$0xff]
    %v23 = vld [vmem:[%s0 + $0x38] sm:$0xff]
    %v24 = vld [vmem:[%s1] sm:$0x1]
    %s25 = sld [smem:[#allocation2]]
    %vm26 = vcmask 261120
    %v28 = vsel %vm26, %v24, 0
    %v31 = vsel %vm26, %v16, 0
    %v34 = vsel %vm26, %v17, 0
    %v37 = vsel %vm26, %v18, 0
    %v40 = vsel %vm26, %v19, 0
    %v43 = vsel %vm26, %v20, 0
    %v46 = vsel %vm26, %v21, 0
    %v49 = vsel %vm26, %v22, 0
    %v52 = vsel %vm26, %v23, 0
    %54 = vmatprep.subr.mxu0 0.0
    %55 = vmatpush1.xpose.msra.mxu0 %v31
    %56 = vmatprep.subr.mxu0 0.0
    %57 = vmatpush1.xpose.msra.mxu0 %v34
    %58 = vmatprep.subr.mxu0 0.0
    %59 = vmatpush1.xpose.msra.mxu0 %v37
    %60 = vmatprep.subr.mxu0 0.0
    %61 = vmatpush1.xpose.msra.mxu0 %v40
    %62 = vmatprep.subr.mxu0 0.0
    %63 = vmatpush1.xpose.msra.mxu0 %v43
    %64 = vmatprep.subr.mxu0 0.0
    %65 = vmatpush1.xpose.msra.mxu0 %v46
    %66 = vmatprep.subr.mxu0 0.0
    %67 = vmatpush1.xpose.msra.mxu0 %v49
    %68 = vmatprep.subr.mxu0 0.0
    %69 = vmatpush1.xpose.msra.mxu0 %v52
    %70 = vmatprep.subr.mxu0 0.0
    %71 = vmatpush1.xpose.msra.mxu0 0.0
    %72 = vmatprep.subr.mxu0 0.0
    %73 = vmatpush1.xpose.msra.mxu0 0.0
    %74 = vmatprep.subr.mxu0 0.0
    %75 = vmatpush1.xpose.msra.mxu0 0.0
    %76 = vmatprep.subr.mxu0 0.0
    %77 = vmatpush1.xpose.msra.mxu0 0.0
    %78 = vmatprep.subr.mxu0 0.0
    %79 = vmatpush1.xpose.msra.mxu0 0.0
    %80 = vmatprep.subr.mxu0 0.0
    %81 = vmatpush1.xpose.msra.mxu0 0.0
    %82 = vmatprep.subr.mxu0 0.0
    %83 = vmatpush1.xpose.msra.mxu0 0.0
    %84 = vmatprep.subr.mxu0 0.0
    %85 = vmatpush1.xpose.msra.mxu0 0.0
    %86 = vmatprep.subr.mxu0 0.0
    %87 = vmatpush1.xpose.msra.mxu0 0.0
    %88 = vmatprep.subr.mxu0 0.0
    %89 = vmatpush1.xpose.msra.mxu0 0.0
    %90 = vmatprep.subr.mxu0 0.0
    %91 = vmatpush1.xpose.msra.mxu0 0.0
    %92 = vmatprep.subr.mxu0 0.0
    %93 = vmatpush1.xpose.msra.mxu0 0.0
    %94 = vmatprep.subr.mxu0 0.0
    %95 = vmatpush1.xpose.msra.mxu0 0.0
    %96 = vmatprep.subr.mxu0 0.0
    %97 = vmatpush1.xpose.msra.mxu0 0.0
    %98 = vmatprep.subr.mxu0 0.0
    %99 = vmatpush1.xpose.msra.mxu0 0.0
    %100 = vmatprep.subr.mxu0 0.0
    %101 = vmatpush1.xpose.msra.mxu0 0.0
    %102 = vmatprep.subr.mxu0 0.0
    %103 = vmatpush1.xpose.msra.mxu0 0.0
    %104 = vmatprep.subr.mxu0 0.0
    %105 = vmatpush1.xpose.msra.mxu0 0.0
    %106 = vmatprep.subr.mxu0 0.0
    %107 = vmatpush1.xpose.msra.mxu0 0.0
    %108 = vmatprep.subr.mxu0 0.0
    %109 = vmatpush1.xpose.msra.mxu0 0.0
    %110 = vmatprep.subr.mxu0 0.0
    %111 = vmatpush1.xpose.msra.mxu0 0.0
    %112 = vmatprep.subr.mxu0 0.0
    %113 = vmatpush1.xpose.msra.mxu0 0.0
    %114 = vmatprep.subr.mxu0 0.0
    %115 = vmatpush1.xpose.msra.mxu0 0.0
    %116 = vmatprep.subr.mxu0 0.0
    %117 = vmatpush1.xpose.msra.mxu0 0.0
    %118 = vmatprep.mubr.f32.mxu0 0.0
    %119 = vmatmul.mubr.f32.gmra.mrb[0].mxu0 %v28
    %v120 = vpop.f32.mrb[0].mxu0
    %v121 = vadd.f32 0.0, %v120
    %v122 = vpop.f32.mrb[0].mxu0
    %123 = vdwg.mxu0
    %vm125 = vcmp.lt.s32.totalorder %v121, 0
    %v126 = vxor.u32 %v121, 2147483647
    %v127 = vsel %vm125, %v126, %v121
    %v128 = vlaneseq
    %v129 = vand.u32 %v128, 127
    %v130 = vsub.s32 63, %v129
    %v131 = vand.u32 %v127, 4294967232
    %v132 = vor.u32 %v131, %v130
    %v133 = vlaneseq
    %v134 = vshrl.u32 %v133, 7
    %vm135 = vcmask 516096
    %v136 = vsel %vm135, %v132, 2147483648
    %v137 = vand.u32 %v136, 65535
    %v138 = vshra.s32 %v136, 16
    %v139 = vcvt.s32.f32 %v137
    %v140 = vcvt.s32.f32 %v138
    %141 = vmax.xlane.f32.xlu0 %v140
    %v142 = vpop.xlane.xlu0 %141
    %vm143 = vcmp.eq.f32.partialorder %v140, %v142
    %v144 = vsel %vm143, %v139, -inf
    %145 = vmax.xlane.f32.xlu0 %v144
    %v146 = vpop.xlane.xlu0 %145
    %v147 = vcvt.f32.s32 %v146
    %v148 = vcvt.f32.s32 %v142
    %v149 = vshll.u32 %v148, 16
    %v150 = vadd.s32 %v149, %v147
    %v151 = vrot.slane %v150, 4
    %vm152 = vcmp.gt.s32.totalorder %v150, %v151
    %v153 = vsel %vm152, %v150, %v151
    %v154 = vrot.slane %v153, 2
    %vm155 = vcmp.gt.s32.totalorder %v153, %v154
    %v156 = vsel %vm155, %v153, %v154
    %v157 = vrot.slane %v156, 1
    %vm158 = vcmp.gt.s32.totalorder %v156, %v157
    %v159 = vsel %vm158, %v156, %v157
    %s160 = vtos %v159
    %vm161 = vcmp.eq.s32.totalorder %v134, 0
    %v162 = vstv %s160
    %v163 = vsel %vm161, %v162, 2147483648
    %vm164 = vcmp.eq.s32.totalorder %v132, %v162
    %v165 = vsel %vm164, 2147483648, %v132
    %v166 = vsel %vm135, %v165, 2147483648
    %v167 = vand.u32 %v166, 65535
    %v168 = vshra.s32 %v166, 16
    %v169 = vcvt.s32.f32 %v167
    %v170 = vcvt.s32.f32 %v168
    %171 = vmax.xlane.f32.xlu0 %v170
    %v172 = vpop.xlane.xlu0 %171
    %vm173 = vcmp.eq.f32.partialorder %v170, %v172
    %v174 = vsel %vm173, %v169, -inf
    %175 = vmax.xlane.f32.xlu0 %v174
    %v176 = vpop.xlane.xlu0 %175
    %v177 = vcvt.f32.s32 %v176
    %v178 = vcvt.f32.s32 %v172
    %v179 = vshll.u32 %v178, 16
    %v180 = vadd.s32 %v179, %v177
    %v181 = vrot.slane %v180, 4
    %vm182 = vcmp.gt.s32.totalorder %v180, %v181
    %v183 = vsel %vm182, %v180, %v181
    %v184 = vrot.slane %v183, 2
    %vm185 = vcmp.gt.s32.totalorder %v183, %v184
    %v186 = vsel %vm185, %v183, %v184
    %v187 = vrot.slane %v186, 1
    %vm188 = vcmp.gt.s32.totalorder %v186, %v187
    %v189 = vsel %vm188, %v186, %v187
    %s190 = vtos %v189
    %vm191 = vcmp.eq.s32.totalorder %v134, 1
    %v192 = vstv %s190
    %v193 = vsel %vm191, %v192, %v163
    %vm194 = vcmp.eq.s32.totalorder %v165, %v192
    %v195 = vsel %vm194, 2147483648, %v165
    %v196 = vsel %vm135, %v195, 2147483648
    %v197 = vand.u32 %v196, 65535
    %v198 = vshra.s32 %v196, 16
    %v199 = vcvt.s32.f32 %v197
    %v200 = vcvt.s32.f32 %v198
    %201 = vmax.xlane.f32.xlu0 %v200
    %v202 = vpop.xlane.xlu0 %201
    %vm203 = vcmp.eq.f32.partialorder %v200, %v202
    %v204 = vsel %vm203, %v199, -inf
    %205 = vmax.xlane.f32.xlu0 %v204
    %v206 = vpop.xlane.xlu0 %205
    %v207 = vcvt.f32.s32 %v206
    %v208 = vcvt.f32.s32 %v202
    %v209 = vshll.u32 %v208, 16
    %v210 = vadd.s32 %v209, %v207
    %v211 = vrot.slane %v210, 4
    %vm212 = vcmp.gt.s32.totalorder %v210, %v211
    %v213 = vsel %vm212, %v210, %v211
    %v214 = vrot.slane %v213, 2
    %vm215 = vcmp.gt.s32.totalorder %v213, %v214
    %v216 = vsel %vm215, %v213, %v214
    %v217 = vrot.slane %v216, 1
    %vm218 = vcmp.gt.s32.totalorder %v216, %v217
    %v219 = vsel %vm218, %v216, %v217
    %s220 = vtos %v219
    %vm221 = vcmp.eq.s32.totalorder %v134, 2
    %v222 = vstv %s220
    %v223 = vsel %vm221, %v222, %v193
    %vm224 = vcmp.eq.s32.totalorder %v195, %v222
    %v225 = vsel %vm224, 2147483648, %v195
    %v226 = vsel %vm135, %v225, 2147483648
    %v227 = vand.u32 %v226, 65535
    %v228 = vshra.s32 %v226, 16
    %v229 = vcvt.s32.f32 %v227
    %v230 = vcvt.s32.f32 %v228
    %231 = vmax.xlane.f32.xlu0 %v230
    %v232 = vpop.xlane.xlu0 %231
    %vm233 = vcmp.eq.f32.partialorder %v230, %v232
    %v234 = vsel %vm233, %v229, -inf
    %235 = vmax.xlane.f32.xlu0 %v234
    %v236 = vpop.xlane.xlu0 %235
    %v237 = vcvt.f32.s32 %v236
    %v238 = vcvt.f32.s32 %v232
    %v239 = vshll.u32 %v238, 16
    %v240 = vadd.s32 %v239, %v237
    %v241 = vrot.slane %v240, 4
    %vm242 = vcmp.gt.s32.totalorder %v240, %v241
    %v243 = vsel %vm242, %v240, %v241
    %v244 = vrot.slane %v243, 2
    %vm245 = vcmp.gt.s32.totalorder %v243, %v244
    %v246 = vsel %vm245, %v243, %v244
    %v247 = vrot.slane %v246, 1
    %vm248 = vcmp.gt.s32.totalorder %v246, %v247
    %v249 = vsel %vm248, %v246, %v247
    %s250 = vtos %v249
    %vm251 = vcmp.eq.s32.totalorder %v134, 3
    %v252 = vstv %s250
    %v253 = vsel %vm251, %v252, %v223
    %vm254 = vcmp.eq.s32.totalorder %v225, %v252
    %v255 = vsel %vm254, 2147483648, %v225
    %v256 = vsel %vm135, %v255, 2147483648
    %v257 = vand.u32 %v256, 65535
    %v258 = vshra.s32 %v256, 16
    %v259 = vcvt.s32.f32 %v257
    %v260 = vcvt.s32.f32 %v258
    %261 = vmax.xlane.f32.xlu0 %v260
    %v262 = vpop.xlane.xlu0 %261
    %vm263 = vcmp.eq.f32.partialorder %v260, %v262
    %v264 = vsel %vm263, %v259, -inf
    %265 = vmax.xlane.f32.xlu0 %v264
    %v266 = vpop.xlane.xlu0 %265
    %v267 = vcvt.f32.s32 %v266
    %v268 = vcvt.f32.s32 %v262
    %v269 = vshll.u32 %v268, 16
    %v270 = vadd.s32 %v269, %v267
    %v271 = vrot.slane %v270, 4
    %vm272 = vcmp.gt.s32.totalorder %v270, %v271
    %v273 = vsel %vm272, %v270, %v271
    %v274 = vrot.slane %v273, 2
    %vm275 = vcmp.gt.s32.totalorder %v273, %v274
    %v276 = vsel %vm275, %v273, %v274
    %v277 = vrot.slane %v276, 1
    %vm278 = vcmp.gt.s32.totalorder %v276, %v277
    %v279 = vsel %vm278, %v276, %v277
    %s280 = vtos %v279
    %vm281 = vcmp.eq.s32.totalorder %v134, 4
    %v282 = vstv %s280
    %v283 = vsel %vm281, %v282, %v253
    %vm284 = vcmp.eq.s32.totalorder %v255, %v282
    %v285 = vsel %vm284, 2147483648, %v255
    %v286 = vsel %vm135, %v285, 2147483648
    %v287 = vand.u32 %v286, 65535
    %v288 = vshra.s32 %v286, 16
    %v289 = vcvt.s32.f32 %v287
    %v290 = vcvt.s32.f32 %v288
    %291 = vmax.xlane.f32.xlu0 %v290
    %v292 = vpop.xlane.xlu0 %291
    %vm293 = vcmp.eq.f32.partialorder %v290, %v292
    %v294 = vsel %vm293, %v289, -inf
    %295 = vmax.xlane.f32.xlu0 %v294
    %v296 = vpop.xlane.xlu0 %295
    %v297 = vcvt.f32.s32 %v296
    %v298 = vcvt.f32.s32 %v292
    %v299 = vshll.u32 %v298, 16
    %v300 = vadd.s32 %v299, %v297
    %v301 = vrot.slane %v300, 4
    %vm302 = vcmp.gt.s32.totalorder %v300, %v301
    %v303 = vsel %vm302, %v300, %v301
    %v304 = vrot.slane %v303, 2
    %vm305 = vcmp.gt.s32.totalorder %v303, %v304
    %v306 = vsel %vm305, %v303, %v304
    %v307 = vrot.slane %v306, 1
    %vm308 = vcmp.gt.s32.totalorder %v306, %v307
    %v309 = vsel %vm308, %v306, %v307
    %s310 = vtos %v309
    %vm311 = vcmp.eq.s32.totalorder %v134, 5
    %v312 = vstv %s310
    %v313 = vsel %vm311, %v312, %v283
    %vm314 = vcmp.eq.s32.totalorder %v285, %v312
    %v315 = vsel %vm314, 2147483648, %v285
    %v316 = vsel %vm135, %v315, 2147483648
    %v317 = vand.u32 %v316, 65535
    %v318 = vshra.s32 %v316, 16
    %v319 = vcvt.s32.f32 %v317
    %v320 = vcvt.s32.f32 %v318
    %321 = vmax.xlane.f32.xlu0 %v320
    %v322 = vpop.xlane.xlu0 %321
    %vm323 = vcmp.eq.f32.partialorder %v320, %v322
    %v324 = vsel %vm323, %v319, -inf
    %325 = vmax.xlane.f32.xlu0 %v324
    %v326 = vpop.xlane.xlu0 %325
    %v327 = vcvt.f32.s32 %v326
    %v328 = vcvt.f32.s32 %v322
    %v329 = vshll.u32 %v328, 16
    %v330 = vadd.s32 %v329, %v327
    %v331 = vrot.slane %v330, 4
    %vm332 = vcmp.gt.s32.totalorder %v330, %v331
    %v333 = vsel %vm332, %v330, %v331
    %v334 = vrot.slane %v333, 2
    %vm335 = vcmp.gt.s32.totalorder %v333, %v334
    %v336 = vsel %vm335, %v333, %v334
    %v337 = vrot.slane %v336, 1
    %vm338 = vcmp.gt.s32.totalorder %v336, %v337
    %v339 = vsel %vm338, %v336, %v337
    %s340 = vtos %v339
    %vm341 = vcmp.eq.s32.totalorder %v134, 6
    %v342 = vstv %s340
    %v343 = vsel %vm341, %v342, %v313
    %vm344 = vcmp.eq.s32.totalorder %v315, %v342
    %v345 = vsel %vm344, 2147483648, %v315
    %v346 = vsel %vm135, %v345, 2147483648
    %v347 = vand.u32 %v346, 65535
    %v348 = vshra.s32 %v346, 16
    %v349 = vcvt.s32.f32 %v347
    %v350 = vcvt.s32.f32 %v348
    %351 = vmax.xlane.f32.xlu0 %v350
    %v352 = vpop.xlane.xlu0 %351
    %vm353 = vcmp.eq.f32.partialorder %v350, %v352
    %v354 = vsel %vm353, %v349, -inf
    %355 = vmax.xlane.f32.xlu0 %v354
    %v356 = vpop.xlane.xlu0 %355
    %v357 = vcvt.f32.s32 %v356
    %v358 = vcvt.f32.s32 %v352
    %v359 = vshll.u32 %v358, 16
    %v360 = vadd.s32 %v359, %v357
    %v361 = vrot.slane %v360, 4
    %vm362 = vcmp.gt.s32.totalorder %v360, %v361
    %v363 = vsel %vm362, %v360, %v361
    %v364 = vrot.slane %v363, 2
    %vm365 = vcmp.gt.s32.totalorder %v363, %v364
    %v366 = vsel %vm365, %v363, %v364
    %v367 = vrot.slane %v366, 1
    %vm368 = vcmp.gt.s32.totalorder %v366, %v367
    %v369 = vsel %vm368, %v366, %v367
    %s370 = vtos %v369
    %vm371 = vcmp.eq.s32.totalorder %v134, 7
    %v372 = vstv %s370
    %v373 = vsel %vm371, %v372, %v343
    %v374 = vlaneseq
    %v375 = vshrl.u32 %v374, 7
    %v376 = vsub.s32 0, %v375
    %v377 = vrot.slane %v132, %v376
    %vm378 = vcmp.eq.s32.totalorder %v377, %v373
    %v379 = vlaneseq
    %v380 = vshrl.u32 %v379, 7
    %v381 = vsub.s32 0, %v380
    %v382 = vrot.slane %v121, %v381
    %v383 = vsel %vm378, %v382, 0.0
    %vm384 = vcmask 523264
    %v385 = vsel %vm384, %v383, 0.0
    %386 = vadd.xlane.f32.xlu0 %v385
    %v387 = vpop.xlane.xlu0 %386
    %v388 = vstv %s25
    %v389 = vmul.f32 %v387, %v388
    %v390 = vtanh.pop %v389
    %v391 = vsel %vm378, 1, 0
    %v392 = vcvt.s32.f32 %v391
    %v394 = vsel %vm384, %v392, 0
    %396 = vmatprep.subr.mxu0 0.0
    %397 = vmatpush1.msra.mxu0 %v16
    %398 = vmatprep.subr.mxu0 0.0
    %399 = vmatpush1.msra.mxu0 %v17
    %400 = vmatprep.subr.mxu0 0.0
    %401 = vmatpush1.msra.mxu0 %v18
    %402 = vmatprep.subr.mxu0 0.0
    %403 = vmatpush1.msra.mxu0 %v19
    %404 = vmatprep.subr.mxu0 0.0
    %405 = vmatpush1.msra.mxu0 %v20
    %406 = vmatprep.subr.mxu0 0.0
    %407 = vmatpush1.msra.mxu0 %v21
    %408 = vmatprep.subr.mxu0 0.0
    %409 = vmatpush1.msra.mxu0 %v22
    %410 = vmatprep.subr.mxu0 0.0
    %411 = vmatpush1.msra.mxu0 %v23
    %412 = vmatprep.subr.mxu0 0.0
    %413 = vmatpush1.msra.mxu0 0.0
    %414 = vmatprep.subr.mxu0 0.0
    %415 = vmatpush1.msra.mxu0 0.0
    %416 = vmatprep.subr.mxu0 0.0
    %417 = vmatpush1.msra.mxu0 0.0
    %418 = vmatprep.subr.mxu0 0.0
    %419 = vmatpush1.msra.mxu0 0.0
    %420 = vmatprep.subr.mxu0 0.0
    %421 = vmatpush1.msra.mxu0 0.0
    %422 = vmatprep.subr.mxu0 0.0
    %423 = vmatpush1.msra.mxu0 0.0
    %424 = vmatprep.subr.mxu0 0.0
    %425 = vmatpush1.msra.mxu0 0.0
    %426 = vmatprep.subr.mxu0 0.0
    %427 = vmatpush1.msra.mxu0 0.0
    %428 = vmatprep.subr.mxu0 0.0
    %429 = vmatpush1.msra.mxu0 0.0
    %430 = vmatprep.subr.mxu0 0.0
    %431 = vmatpush1.msra.mxu0 0.0
    %432 = vmatprep.subr.mxu0 0.0
    %433 = vmatpush1.msra.mxu0 0.0
    %434 = vmatprep.subr.mxu0 0.0
    %435 = vmatpush1.msra.mxu0 0.0
    %436 = vmatprep.subr.mxu0 0.0
    %437 = vmatpush1.msra.mxu0 0.0
    %438 = vmatprep.subr.mxu0 0.0
    %439 = vmatpush1.msra.mxu0 0.0
    %440 = vmatprep.subr.mxu0 0.0
    %441 = vmatpush1.msra.mxu0 0.0
    %442 = vmatprep.subr.mxu0 0.0
    %443 = vmatpush1.msra.mxu0 0.0
    %444 = vmatprep.subr.mxu0 0.0
    %445 = vmatpush1.msra.mxu0 0.0
    %446 = vmatprep.subr.mxu0 0.0
    %447 = vmatpush1.msra.mxu0 0.0
    %448 = vmatprep.subr.mxu0 0.0
    %449 = vmatpush1.msra.mxu0 0.0
    %450 = vmatprep.subr.mxu0 0.0
    %451 = vmatpush1.msra.mxu0 0.0
    %452 = vmatprep.subr.mxu0 0.0
    %453 = vmatpush1.msra.mxu0 0.0
    %454 = vmatprep.subr.mxu0 0.0
    %455 = vmatpush1.msra.mxu0 0.0
    %456 = vmatprep.subr.mxu0 0.0
    %457 = vmatpush1.msra.mxu0 0.0
    %458 = vmatprep.subr.mxu0 0.0
    %459 = vmatpush1.msra.mxu0 0.0
    %460 = vmatprep.mubr.f32.mxu0 0.0
    %461 = vmatmul.mubr.f32.gmra.mrb[0].mxu0 %v394
    %v462 = vpop.f32.mrb[0].mxu0
    %v463 = vadd.f32 0.0, %v462
    %v464 = vpop.f32.mrb[0].mxu0
    %465 = vdwg.mxu0
    %v466 = vmul.f32 %v463, %v390
    %467 = vst.msk [vmem:[#allocation3] sm:$0xff] %vm26, %v466
    // Predicated region
    $region14: #{topk_forward.1} parent=1 // pred_check
      _
    $region15: #{topk_forward.1} parent=1 // pred_check_branch
      %469 = sbr.rel (0) target = $region17
    $region16: #{topk_forward.1} parent=1 // pred_region
      %s471 = ssub.s32 128, 128
      %472 = vsyncadd [#allocation4], %s471
      %s474 = sshll.u32 [#allocation3], 4
      %s475 = int_to_ptr.vmem [resolvable:$true] %s474
      %477 = dma.vmem_to_hbm [thread:$0]  %s475, 128, %s3, [#allocation4]
    $region17: #{topk_forward.1} parent=1 // pred_fallthru
      _
    // Predicated region
    $region18: #{topk_forward.1} parent=1 // pred_check
      _
    $region19: #{topk_forward.1} parent=1 // pred_check_branch
      %479 = sbr.rel (0) target = $region21
    $region20: #{topk_forward.1} parent=1 // pred_region
      %480 = dma.done [#allocation4], 128
    $region21: #{topk_forward.1} parent=1 // pred_fallthru
      _
    %481 = vsyncpa [#allocation4], 1

</llo_original>
